<compile_context>
chip_gen: v7x
topology: tpu7x:2x2x1
jax: 0.10.0
libtpu: 0.0.40
codegen_flags: <defaults>
</compile_context>

<pallas_src>
import functools
import math

import jax
import jax.numpy as jnp
from jax.experimental import pallas as pl
from jax.experimental.pallas import tpu as pltpu

# ---- module hyper-params (consistent with the module __init__) -------------
DIM = 32          # `dim`
HEADS = 4         # `heads`
DIM_HEAD = 16     # `dim_head`
INNER = HEADS * DIM_HEAD          # 64
B = 2             # batch
N = 8             # sequence length

_LANES = 128      # lane width of the packed parameter buffer (one lane tile)


def pack_cross_attention_params(wq, wk, wv, wo, bo, *, heads=HEADS, dim_head=DIM_HEAD):
    """One-time (init-time) packing of all parameters into a single VMEM buffer.

    Layout (rows x 128 lanes, f32):
      [0            , dim)             : Wk|Wv fused              (dim, 2*inner)
      [dim          , 2*dim)           : Wq * scale               (dim, inner)   lanes 0:inner
      [2*dim        , 2*dim+inner)     : block-diag ones matrix   (inner, inner) lanes 0:inner
      [2*dim+inner  , 2*dim+2*inner)   : Wo                       (inner, dim)   lanes 0:dim
      [2*dim+2*inner, +8)              : bias bo in first row     (1, dim)       lanes 0:dim
    """
    dim, inner = wq.shape
    assert inner == heads * dim_head, (inner, heads, dim_head)
    assert wk.shape == (dim, inner) and wv.shape == (dim, inner)
    assert wo.shape == (inner, dim) and bo.shape == (1, dim)
    assert 2 * inner <= _LANES and dim <= _LANES

    scale = dim_head ** (-0.5)
    w_kv = jnp.concatenate([wk, wv], axis=1)                    # (dim, 2*inner)
    wq_scaled = wq * scale                                      # fold softmax scale into Wq

    head_of = jnp.arange(inner) // dim_head
    block_ones = (head_of[:, None] == head_of[None, :]).astype(jnp.float32)  # (inner, inner)

    def _pad_lanes(a):
        return jnp.pad(a, ((0, 0), (0, _LANES - a.shape[1])))

    bo_rows = jnp.pad(bo, ((0, 8 - bo.shape[0]), (0, 0)))       # pad sublanes to 8
    packed = jnp.concatenate(
        [_pad_lanes(w_kv), _pad_lanes(wq_scaled), _pad_lanes(block_ones),
         _pad_lanes(wo), _pad_lanes(bo_rows)], axis=0)
    return packed.astype(jnp.float32)                           # (2*dim + 2*inner + 8, 128)


def _cross_attention_kernel(x_ref, p_ref, o_ref, *, batch, seq, dim, heads, dim_head):
    """Single ungridded invocation: whole problem resident in VMEM."""
    inner = heads * dim_head
    rows = batch * seq

    # Static sub-views of the single packed parameter buffer (one input DMA).
    w_kv = p_ref[0:dim, 0:2 * inner]                            # (dim, 2*inner)
    wq = p_ref[dim:2 * dim, 0:inner]                            # (dim, inner), scale folded in
    block_ones = p_ref[2 * dim:2 * dim + inner, 0:inner]        # (inner, inner)
    wo = p_ref[2 * dim + inner:2 * dim + 2 * inner, 0:dim]      # (inner, dim)
    bo = p_ref[2 * dim + 2 * inner:2 * dim + 2 * inner + 1, 0:dim]   # (1, dim)

    x3 = x_ref[...]                                             # (B, N, dim) f32
    x2 = x3.reshape(rows, dim)                                  # sublane merge only
    x_cls = x3[:, 0:1, :].reshape(batch, dim)                   # CLS rows only (B, dim)

    # MXU pass 1a: fused K|V projection, 128 lanes wide (one pass even on v5e).
    kv = jnp.dot(x2, w_kv, preferred_element_type=jnp.float32)  # (B*N, 2*inner)
    k3 = kv[:, 0:inner].reshape(batch, seq, inner)              # (B, N, inner)
    v3 = kv[:, inner:2 * inner].reshape(batch, seq, inner)      # (B, N, inner)

    # MXU pass 1b (independent of 1a): Q for the B CLS rows only; scale pre-folded.
    q = jnp.dot(x_cls, wq, preferred_element_type=jnp.float32)  # (B, inner)

    # Each batch's CLS query broadcast over that batch's N key rows (VPU).
    prod = q[:, None, :] * k3                                   # (B, N, inner)

    # MXU pass 2: per-head reduction via the block-diagonal ones matrix.  The
    # head sums come out already broadcast across each head's dim_head lanes,
    # so no second "expand back to channels" matmul is needed.
    dots_bc = jnp.dot(prod.reshape(rows, inner), block_ones,
                      preferred_element_type=jnp.float32).reshape(batch, seq, inner)

    # Numerically-stable softmax over keys (axis=1) for all batch*channel lanes
    # at once.  Exact divide: denominator is tiny, approx reciprocal buys nothing.
    m = jnp.max(dots_bc, axis=1, keepdims=True)                 # (B, 1, inner)
    e = jnp.exp(dots_bc - m)                                    # (B, N, inner)
    attn_bc = e / jnp.sum(e, axis=1, keepdims=True)             # (B, N, inner)

    # Weighted sum over keys (VPU multiply + sublane reduce).
    ctx = jnp.sum(attn_bc * v3, axis=1)                         # (B, inner)

    # MXU pass 3: output projection + bias; Dropout(p=0) is identity.
    out = jnp.dot(ctx, wo, preferred_element_type=jnp.float32) + bo   # (B, dim)
    o_ref[...] = out.astype(o_ref.dtype)


def _cross_attention_call(x, packed_params):
    """Hot path: one pallas_call, zero host-side math (params packed at init)."""
    b, n, dim = x.shape
    inner = HEADS * DIM_HEAD
    assert packed_params.shape == (2 * dim + 2 * inner + 8, _LANES), packed_params.shape

    kernel = functools.partial(_cross_attention_kernel, batch=b, seq=n, dim=dim,
                               heads=HEADS, dim_head=DIM_HEAD)
    vmem = pl.BlockSpec(memory_space=pltpu.MemorySpace.VMEM)

    rows = b * n
    flops = (2 * rows * dim * (2 * inner)    # fused K|V projection
             + 2 * b * dim * inner           # Q projection (CLS rows only)
             + 2 * rows * inner * inner      # per-head block-ones reduce
             + 2 * b * inner * dim)          # output projection
    bytes_accessed = 4 * (x.size + packed_params.size + b * dim)

    out2 = pl.pallas_call(
        kernel,
        out_shape=jax.ShapeDtypeStruct((b, dim), x.dtype),
        in_specs=[vmem, vmem],
        out_specs=vmem,
        cost_estimate=pl.CostEstimate(flops=flops,
                                      transcendentals=b * n * inner,
                                      bytes_accessed=bytes_accessed),
    )(x, packed_params)
    return out2.reshape(b, 1, dim)


cross_attention = jax.jit(_cross_attention_call)


def cross_attention_ref(x, wq, wk, wv, wo, bo, *, heads=HEADS, dim_head=DIM_HEAD):
    """Pure-JAX reference mirroring the PyTorch forward (full f32 precision)."""
    hp = jax.lax.Precision.HIGHEST
    scale = dim_head ** (-0.5)
    k = jnp.einsum('bnd,de->bne', x, wk, precision=hp)
    v = jnp.einsum('bnd,de->bne', x, wv, precision=hp)
    q = jnp.einsum('bnd,de->bne', x[:, 0:1, :], wq, precision=hp)
    bsz = x.shape[0]
    kh = k.reshape(bsz, -1, heads, dim_head).transpose(0, 2, 1, 3)
    vh = v.reshape(bsz, -1, heads, dim_head).transpose(0, 2, 1, 3)
    qh = q.reshape(bsz, 1, heads, dim_head).transpose(0, 2, 1, 3)
    dots = jnp.einsum('bhid,bhjd->bhij', qh, kh, precision=hp) * scale
    attn = jax.nn.softmax(dots, axis=-1)
    out = jnp.einsum('bhij,bhjd->bhid', attn, vh, precision=hp)
    out = out.transpose(0, 2, 1, 3).reshape(bsz, 1, heads * dim_head)
    return jnp.einsum('bne,ed->bnd', out, wo, precision=hp) + bo[0]


if __name__ == "__main__":
    key = jax.random.PRNGKey(0)
    kx, kq, kk, kv_, ko, kb = jax.random.split(key, 6)

    x = jax.random.normal(kx, (B, N, DIM), dtype=jnp.float32)

    # Deterministic parameter init (nn.Linear-style uniform bounds); weights are
    # stored already transposed vs. PyTorch: (in_features, out_features).
    lim_in = 1.0 / math.sqrt(DIM)
    lim_inner = 1.0 / math.sqrt(INNER)
    wq = jax.random.uniform(kq, (DIM, INNER), minval=-lim_in, maxval=lim_in,
                            dtype=jnp.float32)
    wk = jax.random.uniform(kk, (DIM, INNER), minval=-lim_in, maxval=lim_in,
                            dtype=jnp.float32)
    wv = jax.random.uniform(kv_, (DIM, INNER), minval=-lim_in, maxval=lim_in,
                            dtype=jnp.float32)
    wo = jax.random.uniform(ko, (INNER, DIM), minval=-lim_inner, maxval=lim_inner,
                            dtype=jnp.float32)
    bo = jax.random.uniform(kb, (1, DIM), minval=-lim_inner, maxval=lim_inner,
                            dtype=jnp.float32)

    # One-time parameter packing (init-time, NOT in the per-call hot path).
    packed = jax.block_until_ready(pack_cross_attention_params(wq, wk, wv, wo, bo))

    out = jax.block_until_ready(cross_attention(x, packed))

    ref = cross_attention_ref(x, wq, wk, wv, wo, bo)
    assert out.shape == (B, 1, DIM)
    # Exact softmax divide now; remaining delta is only MXU f32 multi-pass
    # rounding (~1e-5), so the tolerance is 10x tighter than before.
    assert jnp.allclose(out, ref, atol=5e-4, rtol=5e-4), \
        float(jnp.max(jnp.abs(out - ref)))

    print("KERNEL_OK")
</pallas_src>

<mosaic_0001>
module attributes {stable_mosaic.version = 11 : i64} {
  func.func @_cross_attention_kernel(%arg0: memref<2x8x32xf32, #tpu.memory_space<vmem>>, %arg1: memref<200x128xf32, #tpu.memory_space<vmem>>, %arg2: memref<2x32xf32, #tpu.memory_space<vmem>>) attributes {dimension_semantics = [], scalar_prefetch = 0 : i64, scratch_operands = 0 : i64, tpu.core_type = #tpu.core_type<tc>} {
    %c0 = arith.constant 0 : index
    %c0_0 = arith.constant 0 : index
    %0 = vector.load %arg1[%c0, %c0_0] : memref<200x128xf32, #tpu.memory_space<vmem>>, vector<32x128xf32>
    %c32 = arith.constant 32 : index
    %c0_1 = arith.constant 0 : index
    %1 = vector.load %arg1[%c32, %c0_1] : memref<200x128xf32, #tpu.memory_space<vmem>>, vector<32x64xf32>
    %c64 = arith.constant 64 : index
    %c0_2 = arith.constant 0 : index
    %2 = vector.load %arg1[%c64, %c0_2] : memref<200x128xf32, #tpu.memory_space<vmem>>, vector<64x64xf32>
    %c128 = arith.constant 128 : index
    %c0_3 = arith.constant 0 : index
    %3 = vector.load %arg1[%c128, %c0_3] : memref<200x128xf32, #tpu.memory_space<vmem>>, vector<64x32xf32>
    %c192 = arith.constant 192 : index
    %c0_4 = arith.constant 0 : index
    %4 = vector.load %arg1[%c192, %c0_4] : memref<200x128xf32, #tpu.memory_space<vmem>>, vector<1x32xf32>
    %c0_5 = arith.constant 0 : index
    %c0_6 = arith.constant 0 : index
    %c0_7 = arith.constant 0 : index
    %5 = vector.load %arg0[%c0_5, %c0_6, %c0_7] : memref<2x8x32xf32, #tpu.memory_space<vmem>>, vector<2x8x32xf32>
    %6 = vector.shape_cast %5 : vector<2x8x32xf32> to vector<16x32xf32>
    %7 = vector.extract_strided_slice %5 {offsets = [0, 0, 0], sizes = [2, 1, 32], strides = [1, 1, 1]} : vector<2x8x32xf32> to vector<2x1x32xf32>
    %8 = vector.shape_cast %7 : vector<2x1x32xf32> to vector<2x32xf32>
    %cst = arith.constant dense<0.000000e+00> : vector<16x128xf32>
    %9 = tpu.matmul %6, %0, %cst {dimension_numbers = #tpu.dot_dimension_numbers<[1], [0], [0], [1], [0, 0, 1, 1], [], []>} : vector<16x32xf32>, vector<32x128xf32>, vector<16x128xf32> -> vector<16x128xf32>
    %10 = vector.extract_strided_slice %9 {offsets = [0, 0], sizes = [16, 64], strides = [1, 1]} : vector<16x128xf32> to vector<16x64xf32>
    %11 = vector.shape_cast %10 : vector<16x64xf32> to vector<2x8x64xf32>
    %12 = vector.extract_strided_slice %9 {offsets = [0, 64], sizes = [16, 64], strides = [1, 1]} : vector<16x128xf32> to vector<16x64xf32>
    %13 = vector.shape_cast %12 : vector<16x64xf32> to vector<2x8x64xf32>
    %cst_8 = arith.constant dense<0.000000e+00> : vector<2x64xf32>
    %14 = tpu.matmul %8, %1, %cst_8 {dimension_numbers = #tpu.dot_dimension_numbers<[1], [0], [0], [1], [0, 0, 1, 1], [], []>} : vector<2x32xf32>, vector<32x64xf32>, vector<2x64xf32> -> vector<2x64xf32>
    %15 = vector.shape_cast %14 : vector<2x64xf32> to vector<2x1x64xf32>
    %16 = vector.broadcast %15 : vector<2x1x64xf32> to vector<2x8x64xf32>
    %17 = arith.mulf %16, %11 : vector<2x8x64xf32>
    %18 = vector.shape_cast %17 : vector<2x8x64xf32> to vector<16x64xf32>
    %cst_9 = arith.constant dense<0.000000e+00> : vector<16x64xf32>
    %19 = tpu.matmul %18, %2, %cst_9 {dimension_numbers = #tpu.dot_dimension_numbers<[1], [0], [0], [1], [0, 0, 1, 1], [], []>} : vector<16x64xf32>, vector<64x64xf32>, vector<16x64xf32> -> vector<16x64xf32>
    %20 = vector.shape_cast %19 : vector<16x64xf32> to vector<2x8x64xf32>
    %cst_10 = arith.constant dense<0xFF800000> : vector<2x64xf32>
    %21 = vector.multi_reduction <maximumf>, %20, %cst_10 [1] : vector<2x8x64xf32> to vector<2x64xf32>
    %22 = vector.shape_cast %21 : vector<2x64xf32> to vector<2x1x64xf32>
    %23 = vector.broadcast %22 : vector<2x1x64xf32> to vector<2x8x64xf32>
    %24 = arith.subf %20, %23 : vector<2x8x64xf32>
    %25 = math.exp %24 : vector<2x8x64xf32>
    %cst_11 = arith.constant dense<0.000000e+00> : vector<2x64xf32>
    %26 = vector.multi_reduction <add>, %25, %cst_11 [1] : vector<2x8x64xf32> to vector<2x64xf32>
    %27 = vector.shape_cast %26 : vector<2x64xf32> to vector<2x1x64xf32>
    %28 = vector.broadcast %27 : vector<2x1x64xf32> to vector<2x8x64xf32>
    %29 = arith.divf %25, %28 : vector<2x8x64xf32>
    %30 = arith.mulf %29, %13 : vector<2x8x64xf32>
    %cst_12 = arith.constant dense<0.000000e+00> : vector<2x64xf32>
    %31 = vector.multi_reduction <add>, %30, %cst_12 [1] : vector<2x8x64xf32> to vector<2x64xf32>
    %cst_13 = arith.constant dense<0.000000e+00> : vector<2x32xf32>
    %32 = tpu.matmul %31, %3, %cst_13 {dimension_numbers = #tpu.dot_dimension_numbers<[1], [0], [0], [1], [0, 0, 1, 1], [], []>} : vector<2x64xf32>, vector<64x32xf32>, vector<2x32xf32> -> vector<2x32xf32>
    %33 = vector.broadcast %4 : vector<1x32xf32> to vector<2x32xf32>
    %34 = arith.addf %32, %33 : vector<2x32xf32>
    %c0_14 = arith.constant 0 : index
    %c0_15 = arith.constant 0 : index
    %35 = vector.load %arg2[%c0_14, %c0_15] : memref<2x32xf32, #tpu.memory_space<vmem>>, vector<2x32xf32>
    tpu.vector_store %arg2[%c0_14, %c0_15], %34 {strides = array<i32>} : memref<2x32xf32, #tpu.memory_space<vmem>>, vector<2x32xf32>,
    return
  }
}

</mosaic_0001>

<llo_original>
// kernel: _cross_attention_call.1
$region0: #{_cross_attention_call.1}
  #allocation0 [shape = 'u32[]', space=smem, size = 0x4, offset = 0x4, fixed_abs, tag = 'smem constant byte address 0x4 - core index']
  #allocation1 [shape = 'u32[144,128]{1,0:T(1,128)}', space=vmem, size = 0x12000, scoped, tag = 'internal scratch']
  %s0 = inlined_call_operand.hbm [shape: f32[2,8,32], index: 0, kind: input, shape index: {}]
  %s1 = inlined_call_operand.hbm [shape: f32[200,128], index: 1, kind: input, shape index: {}]
  %s2 = inlined_call_operand.hbm [shape: f32[2,32], index: 2, kind: output, shape index: {}]
  %s3 = sld [smem:[#allocation0]]
  $region26: #{_cross_attention_call.1} parent=0
    _
  %s5 = ssub.s32 1, %s3
  %s6 = scalar_select 0, %s5, %s3
  $region1: #{_cross_attention_call.1} parent=0
    #allocation2 [shape = 'u8[8192]{0}', space=vmem, size = 0x2000, scoped, tag = 'input window, operand 0, single buffered']
    #allocation3 [shape = 's32[1]{0}', space=sflag, size = 0x4, scoped, tag = 'scoped memory for _cross_attention_call.1']
    #allocation4 [shape = 's32[1]{0}', space=sflag, size = 0x4, scoped, tag = 'scoped memory for _cross_attention_call.1']
    #allocation5 [shape = 'u8[102400]{0}', space=vmem, size = 0x19000, scoped, tag = 'input window, operand 1, single buffered']
    #allocation6 [shape = 's32[1]{0}', space=sflag, size = 0x4, scoped, tag = 'scoped memory for _cross_attention_call.1']
    #allocation7 [shape = 'u8[1024]{0}', space=vmem, size = 0x400, scoped, tag = 'output window, operand 0, single buffered']
    %7 = vsyncpa [#allocation3], 0
    %8 = vsyncpa [#allocation6], 0
    %9 = vsyncpa [#allocation4], 0
    // Predicated region
    $region2: #{_cross_attention_call.1} parent=1 // pred_check
      _
    $region3: #{_cross_attention_call.1} parent=1 // pred_check_branch
      %11 = sbr.rel (0) target = $region5
    $region4: #{_cross_attention_call.1} parent=1 // pred_region
      %s13 = ssub.s32 256, 256
      %14 = vsyncadd [#allocation3], %s13
      %s15 = sshll.u32 [#allocation2], 4
      %s16 = int_to_ptr.vmem [resolvable:$true] %s15
      %21 = dma.hbm_to_vmem [thread:$0]  %s0, 256, %s16, [#allocation3], 128, 128, 8
    $region5: #{_cross_attention_call.1} parent=1 // pred_fallthru
      _
    // Predicated region
    $region6: #{_cross_attention_call.1} parent=1 // pred_check
      _
    $region7: #{_cross_attention_call.1} parent=1 // pred_check_branch
      %23 = sbr.rel (0) target = $region9
    $region8: #{_cross_attention_call.1} parent=1 // pred_region
      %s25 = ssub.s32 3200, 3200
      %26 = vsyncadd [#allocation6], %s25
      %s27 = sshll.u32 [#allocation5], 4
      %s28 = int_to_ptr.vmem [resolvable:$true] %s27
      %33 = dma.hbm_to_vmem [thread:$0]  %s1, 3200, %s28, [#allocation6], 128, 128, 8
    $region9: #{_cross_attention_call.1} parent=1 // pred_fallthru
      _
    // Predicated region
    $region10: #{_cross_attention_call.1} parent=1 // pred_check
      _
    $region11: #{_cross_attention_call.1} parent=1 // pred_check_branch
      %35 = sbr.rel (0) target = $region13
    $region12: #{_cross_attention_call.1} parent=1 // pred_region
      %36 = dma.done [#allocation3], 256
    $region13: #{_cross_attention_call.1} parent=1 // pred_fallthru
      _
    // Predicated region
    $region14: #{_cross_attention_call.1} parent=1 // pred_check
      _
    $region15: #{_cross_attention_call.1} parent=1 // pred_check_branch
      %38 = sbr.rel (0) target = $region17
    $region16: #{_cross_attention_call.1} parent=1 // pred_region
      %39 = dma.done [#allocation6], 3200
    $region17: #{_cross_attention_call.1} parent=1 // pred_fallthru
      _
    %v40 = vld [vmem:[#allocation5] sm:$0xff]
    %v41 = vld [vmem:[#allocation5 + $0x8] sm:$0xff]
    %v42 = vld [vmem:[#allocation5 + $0x10] sm:$0xff]
    %v43 = vld [vmem:[#allocation5 + $0x18] sm:$0xff]
    %v44 = vld [vmem:[#allocation5 + $0x20] sm:$0xff]
    %v45 = vld [vmem:[#allocation5 + $0x28] sm:$0xff]
    %v46 = vld [vmem:[#allocation5 + $0x30] sm:$0xff]
    %v47 = vld [vmem:[#allocation5 + $0x38] sm:$0xff]
    %v48 = vld [vmem:[#allocation5 + $0x40] sm:$0xff]
    %v49 = vld [vmem:[#allocation5 + $0x48] sm:$0xff]
    %v50 = vld [vmem:[#allocation5 + $0x50] sm:$0xff]
    %v51 = vld [vmem:[#allocation5 + $0x58] sm:$0xff]
    %v52 = vld [vmem:[#allocation5 + $0x60] sm:$0xff]
    %v53 = vld [vmem:[#allocation5 + $0x68] sm:$0xff]
    %v54 = vld [vmem:[#allocation5 + $0x70] sm:$0xff]
    %v55 = vld [vmem:[#allocation5 + $0x78] sm:$0xff]
    %v56 = vld [vmem:[#allocation5 + $0x80] sm:$0xff]
    %v57 = vld [vmem:[#allocation5 + $0x88] sm:$0xff]
    %v58 = vld [vmem:[#allocation5 + $0x90] sm:$0xff]
    %v59 = vld [vmem:[#allocation5 + $0x98] sm:$0xff]
    %v60 = vld [vmem:[#allocation5 + $0xa0] sm:$0xff]
    %v61 = vld [vmem:[#allocation5 + $0xa8] sm:$0xff]
    %v62 = vld [vmem:[#allocation5 + $0xb0] sm:$0xff]
    %v63 = vld [vmem:[#allocation5 + $0xb8] sm:$0xff]
    %v64 = vld [vmem:[#allocation5 + $0xc0] sm:$0x1]
    %v65 = vld [vmem:[#allocation2] sm:$0xff]
    %v66 = vld [vmem:[#allocation2 + $0x8] sm:$0xff]
    %vm67 = vcmask 261120
    %v69 = vsel %vm67, %v65, 0
    %v72 = vsel %vm67, %v66, 0
    %74 = vmatprep.subr.mxu0 0.0
    %75 = vmatpush1.msra.mxu0 %v40
    %76 = vmatprep.subr.mxu0 0.0
    %77 = vmatpush1.msra.mxu0 %v41
    %78 = vmatprep.subr.mxu0 0.0
    %79 = vmatpush1.msra.mxu0 %v42
    %80 = vmatprep.subr.mxu0 0.0
    %81 = vmatpush1.msra.mxu0 %v43
    %82 = vmatprep.subr.mxu0 0.0
    %83 = vmatpush1.msra.mxu0 0.0
    %84 = vmatprep.subr.mxu0 0.0
    %85 = vmatpush1.msra.mxu0 0.0
    %86 = vmatprep.subr.mxu0 0.0
    %87 = vmatpush1.msra.mxu0 0.0
    %88 = vmatprep.subr.mxu0 0.0
    %89 = vmatpush1.msra.mxu0 0.0
    %90 = vmatprep.subr.mxu0 0.0
    %91 = vmatpush1.msra.mxu0 0.0
    %92 = vmatprep.subr.mxu0 0.0
    %93 = vmatpush1.msra.mxu0 0.0
    %94 = vmatprep.subr.mxu0 0.0
    %95 = vmatpush1.msra.mxu0 0.0
    %96 = vmatprep.subr.mxu0 0.0
    %97 = vmatpush1.msra.mxu0 0.0
    %98 = vmatprep.subr.mxu0 0.0
    %99 = vmatpush1.msra.mxu0 0.0
    %100 = vmatprep.subr.mxu0 0.0
    %101 = vmatpush1.msra.mxu0 0.0
    %102 = vmatprep.subr.mxu0 0.0
    %103 = vmatpush1.msra.mxu0 0.0
    %104 = vmatprep.subr.mxu0 0.0
    %105 = vmatpush1.msra.mxu0 0.0
    %106 = vmatprep.subr.mxu0 0.0
    %107 = vmatpush1.msra.mxu0 0.0
    %108 = vmatprep.subr.mxu0 0.0
    %109 = vmatpush1.msra.mxu0 0.0
    %110 = vmatprep.subr.mxu0 0.0
    %111 = vmatpush1.msra.mxu0 0.0
    %112 = vmatprep.subr.mxu0 0.0
    %113 = vmatpush1.msra.mxu0 0.0
    %114 = vmatprep.subr.mxu0 0.0
    %115 = vmatpush1.msra.mxu0 0.0
    %116 = vmatprep.subr.mxu0 0.0
    %117 = vmatpush1.msra.mxu0 0.0
    %118 = vmatprep.subr.mxu0 0.0
    %119 = vmatpush1.msra.mxu0 0.0
    %120 = vmatprep.subr.mxu0 0.0
    %121 = vmatpush1.msra.mxu0 0.0
    %122 = vmatprep.subr.mxu0 0.0
    %123 = vmatpush1.msra.mxu0 0.0
    %124 = vmatprep.subr.mxu0 0.0
    %125 = vmatpush1.msra.mxu0 0.0
    %126 = vmatprep.subr.mxu0 0.0
    %127 = vmatpush1.msra.mxu0 0.0
    %128 = vmatprep.subr.mxu0 0.0
    %129 = vmatpush1.msra.mxu0 0.0
    %130 = vmatprep.subr.mxu0 0.0
    %131 = vmatpush1.msra.mxu0 0.0
    %132 = vmatprep.subr.mxu0 0.0
    %133 = vmatpush1.msra.mxu0 0.0
    %134 = vmatprep.subr.mxu0 0.0
    %135 = vmatpush1.msra.mxu0 0.0
    %136 = vmatprep.subr.mxu0 0.0
    %137 = vmatpush1.msra.mxu0 0.0
    %138 = vmatprep.mubr.f32.mxu0 0.0
    %139 = vmatmul.mubr.f32.gmra.mrb[0].mxu0 %v69
    %v140 = vpop.f32.mrb[0].mxu0
    %v141 = vadd.f32 0.0, %v140
    %v142 = vpop.f32.mrb[0].mxu0
    %143 = vmatprep.mubr.f32.mxu0 0.0
    %144 = vmatmul.mubr.f32.gmra.mrb[0].mxu0 %v72
    %v145 = vpop.f32.mrb[0].mxu0
    %v146 = vadd.f32 0.0, %v145
    %v147 = vpop.f32.mrb[0].mxu0
    %148 = vdwg.mxu0
    %v149 = vrot.slane %v66, 7
    %vm150 = vcmask 1041409
    %v151 = vsel %vm150, %v149, %v65
    %v152 = vsel %vm67, %v151, 0
    %154 = vmatprep.subr.mxu0 0.0
    %155 = vmatpush1.msra.mxu0 %v44
    %156 = vmatprep.subr.mxu0 0.0
    %157 = vmatpush1.msra.mxu0 %v45
    %158 = vmatprep.subr.mxu0 0.0
    %159 = vmatpush1.msra.mxu0 %v46
    %160 = vmatprep.subr.mxu0 0.0
    %161 = vmatpush1.msra.mxu0 %v47
    %162 = vmatprep.subr.mxu0 0.0
    %163 = vmatpush1.msra.mxu0 0.0
    %164 = vmatprep.subr.mxu0 0.0
    %165 = vmatpush1.msra.mxu0 0.0
    %166 = vmatprep.subr.mxu0 0.0
    %167 = vmatpush1.msra.mxu0 0.0
    %168 = vmatprep.subr.mxu0 0.0
    %169 = vmatpush1.msra.mxu0 0.0
    %170 = vmatprep.subr.mxu0 0.0
    %171 = vmatpush1.msra.mxu0 0.0
    %172 = vmatprep.subr.mxu0 0.0
    %173 = vmatpush1.msra.mxu0 0.0
    %174 = vmatprep.subr.mxu0 0.0
    %175 = vmatpush1.msra.mxu0 0.0
    %176 = vmatprep.subr.mxu0 0.0
    %177 = vmatpush1.msra.mxu0 0.0
    %178 = vmatprep.subr.mxu0 0.0
    %179 = vmatpush1.msra.mxu0 0.0
    %180 = vmatprep.subr.mxu0 0.0
    %181 = vmatpush1.msra.mxu0 0.0
    %182 = vmatprep.subr.mxu0 0.0
    %183 = vmatpush1.msra.mxu0 0.0
    %184 = vmatprep.subr.mxu0 0.0
    %185 = vmatpush1.msra.mxu0 0.0
    %186 = vmatprep.subr.mxu0 0.0
    %187 = vmatpush1.msra.mxu0 0.0
    %188 = vmatprep.subr.mxu0 0.0
    %189 = vmatpush1.msra.mxu0 0.0
    %190 = vmatprep.subr.mxu0 0.0
    %191 = vmatpush1.msra.mxu0 0.0
    %192 = vmatprep.subr.mxu0 0.0
    %193 = vmatpush1.msra.mxu0 0.0
    %194 = vmatprep.subr.mxu0 0.0
    %195 = vmatpush1.msra.mxu0 0.0
    %196 = vmatprep.subr.mxu0 0.0
    %197 = vmatpush1.msra.mxu0 0.0
    %198 = vmatprep.subr.mxu0 0.0
    %199 = vmatpush1.msra.mxu0 0.0
    %200 = vmatprep.subr.mxu0 0.0
    %201 = vmatpush1.msra.mxu0 0.0
    %202 = vmatprep.subr.mxu0 0.0
    %203 = vmatpush1.msra.mxu0 0.0
    %204 = vmatprep.subr.mxu0 0.0
    %205 = vmatpush1.msra.mxu0 0.0
    %206 = vmatprep.subr.mxu0 0.0
    %207 = vmatpush1.msra.mxu0 0.0
    %208 = vmatprep.subr.mxu0 0.0
    %209 = vmatpush1.msra.mxu0 0.0
    %210 = vmatprep.subr.mxu0 0.0
    %211 = vmatpush1.msra.mxu0 0.0
    %212 = vmatprep.subr.mxu0 0.0
    %213 = vmatpush1.msra.mxu0 0.0
    %214 = vmatprep.subr.mxu0 0.0
    %215 = vmatpush1.msra.mxu0 0.0
    %216 = vmatprep.subr.mxu0 0.0
    %217 = vmatpush1.msra.mxu0 0.0
    %218 = vmatprep.mubr.f32.mxu0 0.0
    %219 = vmatmul.mubr.f32.gmra.mrb[0].mxu0 %v152
    %v220 = vpop.f32.mrb[0].mxu0
    %v221 = vadd.f32 0.0, %v220
    %v222 = vpop.f32.mrb[0].mxu0
    %223 = vdwg.mxu0
    %v226 = vunpack.c.l.s4 1966171168
    %v227 = vunpack.c.0.s8 %v226
    %v228 = vlaneseq
    %v229 = vshrl.u32 %v228, 7
    %v230 = vsub.s32 %v227, %v229
    %v231 = vrot.slane %v221, %v230
    %v232 = vcombine.high %v231, %v231
    %v234 = vunpack.c.l.s4 1966171168
    %v235 = vunpack.c.0.s8 %v234
    %v236 = vlaneseq
    %v237 = vshrl.u32 %v236, 7
    %v238 = vsub.s32 %v235, %v237
    %v239 = vrot.slane %v231, %v238
    %v241 = vunpack.c.l.s4 1966171168
    %v242 = vunpack.c.0.s8 %v241
    %v243 = vlaneseq
    %v244 = vshrl.u32 %v243, 7
    %v245 = vsub.s32 %v242, %v244
    %v246 = vrot.slane %v232, %v245
    %v247 = vlaneseq
    %v248 = vshrl.u32 %v247, 7
    %v249 = vsub.s32 0, %v248
    %v250 = vrot.slane %v239, %v249
    %v251 = vlaneseq
    %v252 = vshrl.u32 %v251, 7
    %v253 = vsub.s32 0, %v252
    %v254 = vrot.slane %v246, %v253
    %v257 = vmul.f32 %v250, %v141
    %v258 = vmul.f32 %v254, %v146
    %vm259 = vcmask 523264
    %v261 = vsel %vm259, %v257, 0
    %v264 = vsel %vm259, %v258, 0
    %266 = vmatprep.subr.mxu0 0.0
    %267 = vmatpush1.msra.mxu0 %v48
    %268 = vmatprep.subr.mxu0 0.0
    %269 = vmatpush1.msra.mxu0 %v49
    %270 = vmatprep.subr.mxu0 0.0
    %271 = vmatpush1.msra.mxu0 %v50
    %272 = vmatprep.subr.mxu0 0.0
    %273 = vmatpush1.msra.mxu0 %v51
    %274 = vmatprep.subr.mxu0 0.0
    %275 = vmatpush1.msra.mxu0 %v52
    %276 = vmatprep.subr.mxu0 0.0
    %277 = vmatpush1.msra.mxu0 %v53
    %278 = vmatprep.subr.mxu0 0.0
    %279 = vmatpush1.msra.mxu0 %v54
    %280 = vmatprep.subr.mxu0 0.0
    %281 = vmatpush1.msra.mxu0 %v55
    %282 = vmatprep.subr.mxu0 0.0
    %283 = vmatpush1.msra.mxu0 0.0
    %284 = vmatprep.subr.mxu0 0.0
    %285 = vmatpush1.msra.mxu0 0.0
    %286 = vmatprep.subr.mxu0 0.0
    %287 = vmatpush1.msra.mxu0 0.0
    %288 = vmatprep.subr.mxu0 0.0
    %289 = vmatpush1.msra.mxu0 0.0
    %290 = vmatprep.subr.mxu0 0.0
    %291 = vmatpush1.msra.mxu0 0.0
    %292 = vmatprep.subr.mxu0 0.0
    %293 = vmatpush1.msra.mxu0 0.0
    %294 = vmatprep.subr.mxu0 0.0
    %295 = vmatpush1.msra.mxu0 0.0
    %296 = vmatprep.subr.mxu0 0.0
    %297 = vmatpush1.msra.mxu0 0.0
    %298 = vmatprep.subr.mxu0 0.0
    %299 = vmatpush1.msra.mxu0 0.0
    %300 = vmatprep.subr.mxu0 0.0
    %301 = vmatpush1.msra.mxu0 0.0
    %302 = vmatprep.subr.mxu0 0.0
    %303 = vmatpush1.msra.mxu0 0.0
    %304 = vmatprep.subr.mxu0 0.0
    %305 = vmatpush1.msra.mxu0 0.0
    %306 = vmatprep.subr.mxu0 0.0
    %307 = vmatpush1.msra.mxu0 0.0
    %308 = vmatprep.subr.mxu0 0.0
    %309 = vmatpush1.msra.mxu0 0.0
    %310 = vmatprep.subr.mxu0 0.0
    %311 = vmatpush1.msra.mxu0 0.0
    %312 = vmatprep.subr.mxu0 0.0
    %313 = vmatpush1.msra.mxu0 0.0
    %314 = vmatprep.subr.mxu0 0.0
    %315 = vmatpush1.msra.mxu0 0.0
    %316 = vmatprep.subr.mxu0 0.0
    %317 = vmatpush1.msra.mxu0 0.0
    %318 = vmatprep.subr.mxu0 0.0
    %319 = vmatpush1.msra.mxu0 0.0
    %320 = vmatprep.subr.mxu0 0.0
    %321 = vmatpush1.msra.mxu0 0.0
    %322 = vmatprep.subr.mxu0 0.0
    %323 = vmatpush1.msra.mxu0 0.0
    %324 = vmatprep.subr.mxu0 0.0
    %325 = vmatpush1.msra.mxu0 0.0
    %326 = vmatprep.subr.mxu0 0.0
    %327 = vmatpush1.msra.mxu0 0.0
    %328 = vmatprep.subr.mxu0 0.0
    %329 = vmatpush1.msra.mxu0 0.0
    %330 = vmatprep.mubr.f32.mxu0 0.0
    %331 = vmatmul.mubr.f32.gmra.mrb[0].mxu0 %v261
    %v332 = vpop.f32.mrb[0].mxu0
    %v333 = vadd.f32 0.0, %v332
    %v334 = vpop.f32.mrb[0].mxu0
    %335 = vmatprep.mubr.f32.mxu0 0.0
    %336 = vmatmul.mubr.f32.gmra.mrb[0].mxu0 %v264
    %v337 = vpop.f32.mrb[0].mxu0
    %v338 = vadd.f32 0.0, %v337
    %v339 = vpop.f32.mrb[0].mxu0
    %340 = vdwg.mxu0
    %v341 = vsel %vm259, %v333, -inf
    %v342 = vrot.slane %v341, 4
    %v343 = vmax.f32 %v341, %v342
    %v344 = vrot.slane %v343, 2
    %v345 = vmax.f32 %v343, %v344
    %v346 = vrot.slane %v345, 1
    %v347 = vmax.f32 %v345, %v346
    %v348 = vsel %vm259, %v338, -inf
    %v349 = vrot.slane %v348, 4
    %v350 = vmax.f32 %v348, %v349
    %v351 = vrot.slane %v350, 2
    %v352 = vmax.f32 %v350, %v351
    %v353 = vrot.slane %v352, 1
    %v354 = vmax.f32 %v352, %v353
    %v355 = vsub.f32 %v333, %v347
    %v356 = vsub.f32 %v338, %v354
    %v357 = vmul.f32 %v355, 1.442695
    %v358 = vpow.pop %v357
    %v359 = vmul.f32 %v356, 1.442695
    %v360 = vpow.pop %v359
    %v361 = vsel %vm259, %v358, 0.0
    %v362 = vrot.slane %v361, 4
    %v363 = vadd.f32 %v361, %v362
    %v364 = vrot.slane %v363, 2
    %v365 = vadd.f32 %v363, %v364
    %v366 = vrot.slane %v365, 1
    %v367 = vadd.f32 %v365, %v366
    %v368 = vsel %vm259, %v360, 0.0
    %v369 = vrot.slane %v368, 4
    %v370 = vadd.f32 %v368, %v369
    %v371 = vrot.slane %v370, 2
    %v372 = vadd.f32 %v370, %v371
    %v373 = vrot.slane %v372, 1
    %v374 = vadd.f32 %v372, %v373
    %v375 = vrcp.pop %v367
    %v376 = vmul.f32 %v358, %v375
    %v377 = vrcp.pop %v374
    %v378 = vmul.f32 %v360, %v377
    %381 = vrot.lane.b32.xlu0 %v141, 64
    %v382 = vpop.permute.xlu0 %381
    %383 = vrot.lane.b32.xlu0 %v146, 64
    %v384 = vpop.permute.xlu0 %383
    %v387 = vmul.f32 %v376, %v382
    %v388 = vmul.f32 %v378, %v384
    %v389 = vsel %vm259, %v387, 0.0
    %v390 = vrot.slane %v389, 4
    %v391 = vadd.f32 %v389, %v390
    %v392 = vrot.slane %v391, 2
    %v393 = vadd.f32 %v391, %v392
    %v394 = vrot.slane %v393, 1
    %v395 = vadd.f32 %v393, %v394
    %v396 = vsel %vm259, %v388, 0.0
    %v397 = vrot.slane %v396, 4
    %v398 = vadd.f32 %v396, %v397
    %v399 = vrot.slane %v398, 2
    %v400 = vadd.f32 %v398, %v399
    %v401 = vrot.slane %v400, 1
    %v402 = vadd.f32 %v400, %v401
    %v403 = vlaneseq
    %v404 = vshrl.u32 %v403, 7
    %v405 = vsub.s32 0, %v404
    %v406 = vrot.slane %v64, %v405
    %v409 = vsel %vm150, %v402, %v395
    %v410 = vsel %vm259, %v409, 0
    %412 = vmatprep.subr.mxu0 0.0
    %413 = vmatpush1.msra.mxu0 %v56
    %414 = vmatprep.subr.mxu0 0.0
    %415 = vmatpush1.msra.mxu0 %v57
    %416 = vmatprep.subr.mxu0 0.0
    %417 = vmatpush1.msra.mxu0 %v58
    %418 = vmatprep.subr.mxu0 0.0
    %419 = vmatpush1.msra.mxu0 %v59
    %420 = vmatprep.subr.mxu0 0.0
    %421 = vmatpush1.msra.mxu0 %v60
    %422 = vmatprep.subr.mxu0 0.0
    %423 = vmatpush1.msra.mxu0 %v61
    %424 = vmatprep.subr.mxu0 0.0
    %425 = vmatpush1.msra.mxu0 %v62
    %426 = vmatprep.subr.mxu0 0.0
    %427 = vmatpush1.msra.mxu0 %v63
    %428 = vmatprep.subr.mxu0 0.0
    %429 = vmatpush1.msra.mxu0 0.0
    %430 = vmatprep.subr.mxu0 0.0
    %431 = vmatpush1.msra.mxu0 0.0
    %432 = vmatprep.subr.mxu0 0.0
    %433 = vmatpush1.msra.mxu0 0.0
    %434 = vmatprep.subr.mxu0 0.0
    %435 = vmatpush1.msra.mxu0 0.0
    %436 = vmatprep.subr.mxu0 0.0
    %437 = vmatpush1.msra.mxu0 0.0
    %438 = vmatprep.subr.mxu0 0.0
    %439 = vmatpush1.msra.mxu0 0.0
    %440 = vmatprep.subr.mxu0 0.0
    %441 = vmatpush1.msra.mxu0 0.0
    %442 = vmatprep.subr.mxu0 0.0
    %443 = vmatpush1.msra.mxu0 0.0
    %444 = vmatprep.subr.mxu0 0.0
    %445 = vmatpush1.msra.mxu0 0.0
    %446 = vmatprep.subr.mxu0 0.0
    %447 = vmatpush1.msra.mxu0 0.0
    %448 = vmatprep.subr.mxu0 0.0
    %449 = vmatpush1.msra.mxu0 0.0
    %450 = vmatprep.subr.mxu0 0.0
    %451 = vmatpush1.msra.mxu0 0.0
    %452 = vmatprep.subr.mxu0 0.0
    %453 = vmatpush1.msra.mxu0 0.0
    %454 = vmatprep.subr.mxu0 0.0
    %455 = vmatpush1.msra.mxu0 0.0
    %456 = vmatprep.subr.mxu0 0.0
    %457 = vmatpush1.msra.mxu0 0.0
    %458 = vmatprep.subr.mxu0 0.0
    %459 = vmatpush1.msra.mxu0 0.0
    %460 = vmatprep.subr.mxu0 0.0
    %461 = vmatpush1.msra.mxu0 0.0
    %462 = vmatprep.subr.mxu0 0.0
    %463 = vmatpush1.msra.mxu0 0.0
    %464 = vmatprep.subr.mxu0 0.0
    %465 = vmatpush1.msra.mxu0 0.0
    %466 = vmatprep.subr.mxu0 0.0
    %467 = vmatpush1.msra.mxu0 0.0
    %468 = vmatprep.subr.mxu0 0.0
    %469 = vmatpush1.msra.mxu0 0.0
    %470 = vmatprep.subr.mxu0 0.0
    %471 = vmatpush1.msra.mxu0 0.0
    %472 = vmatprep.subr.mxu0 0.0
    %473 = vmatpush1.msra.mxu0 0.0
    %474 = vmatprep.subr.mxu0 0.0
    %475 = vmatpush1.msra.mxu0 0.0
    %476 = vmatprep.mubr.f32.mxu0 0.0
    %477 = vmatmul.mubr.f32.gmra.mrb[0].mxu0 %v410
    %v478 = vpop.f32.mrb[0].mxu0
    %v479 = vadd.f32 %v406, %v478
    %v480 = vpop.f32.mrb[0].mxu0
    %481 = vdwg.mxu0
    %vm482 = vcmask 254976
    %483 = vst.msk [vmem:[#allocation7] sm:$0x3] %vm482, %v479
    // Predicated region
    $region18: #{_cross_attention_call.1} parent=1 // pred_check
      _
    $region19: #{_cross_attention_call.1} parent=1 // pred_check_branch
      %485 = sbr.rel (0) target = $region21
    $region20: #{_cross_attention_call.1} parent=1 // pred_region
      %s487 = ssub.s32 32, 32
      %488 = vsyncadd [#allocation4], %s487
      %s490 = sshll.u32 [#allocation7], 4
      %s491 = int_to_ptr.vmem [resolvable:$true] %s490
      %493 = dma.vmem_to_hbm [thread:$0]  %s491, 32, %s2, [#allocation4]
    $region21: #{_cross_attention_call.1} parent=1 // pred_fallthru
      _
    // Predicated region
    $region22: #{_cross_attention_call.1} parent=1 // pred_check
      _
    $region23: #{_cross_attention_call.1} parent=1 // pred_check_branch
      %495 = sbr.rel (0) target = $region25
    $region24: #{_cross_attention_call.1} parent=1 // pred_region
      %496 = dma.done [#allocation4], 32
    $region25: #{_cross_attention_call.1} parent=1 // pred_fallthru
      _
    %497 = vsyncpa [#allocation3], 1
    %498 = vsyncpa [#allocation6], 1
    %499 = vsyncpa [#allocation4], 1

</llo_original>
